<compile_context>
chip_gen: v7x
topology: tpu7x:2x2x1
jax: 0.10.0
libtpu: 0.0.40
codegen_flags: <defaults>
</compile_context>

<pallas_src>
import functools

import jax
import jax.numpy as jnp
from jax.experimental import pallas as pl
from jax.experimental.pallas import tpu as pltpu


# ----------------------------- helpers --------------------------------------

def _round_up(x, m):
    return ((x + m - 1) // m) * m


def _cdiv(a, b):
    return (a + b - 1) // b


def _even_tiles(n, cap, align):
    """Split n rows into the fewest blocks of size <= cap (aligned); rows are
    spread evenly so round-up waste is < n_blocks * align."""
    cap = max(align, (cap // align) * align)
    if n <= cap:
        t = _round_up(max(n, 1), align)
        return t, t
    nb = _cdiv(n, cap)
    t = _round_up(_cdiv(n, nb), align)
    return t, t * nb


def _largest_tile(dim, cap):
    """Largest multiple of 128 that divides `dim` (a multiple of 128) and is
    <= cap.  Floors at 128."""
    q = dim // 128
    best, d = 1, 1
    while d * d <= q:
        if q % d == 0:
            for c in (d, q // d):
                if c * 128 <= cap and c > best:
                    best = c
        d += 1
    return best * 128


# ----------------------------- offset path ----------------------------------

_OFFSET_VMEM_BUDGET = 8 << 20   # fits v5e's 16 MiB scoped default with headroom


def _offset_kernel(x_ref, off_ref, o_ref):
    # x_ref: [tm, te], off_ref: [1, te] (broadcast over sublanes), o_ref: [tm, te]
    o_ref[...] = x_ref[...] + off_ref[...]


@functools.partial(jax.jit, static_argnames=("vmem_budget",))
def offset_forward(x, offset, vmem_budget=_OFFSET_VMEM_BUDGET):
    """x: [B, E], offset: [E]  ->  x + offset (broadcast over batch)."""
    B, E = x.shape
    elt = x.dtype.itemsize
    off2d = offset.reshape(1, E).astype(x.dtype)

    # Lane tiling: keep the full embedding per block unless even an 8-row
    # block would exceed the budget (in+out double-buffered ~ 4*tm*te*elt).
    if E <= 128 or 4 * 8 * E * elt <= vmem_budget:
        te, Ep = E, E
    else:
        te_cap = max(128, (vmem_budget // (4 * 8 * elt)) // 128 * 128)
        te = min(te_cap, _round_up(E, 128))
        Ep = _round_up(E, te)

    tm_cap = max(8, min(512, (vmem_budget // (4 * te * elt)) // 8 * 8))
    tm, Bp = _even_tiles(B, tm_cap, 8)

    xp = x if (Bp, Ep) == (B, E) else jnp.pad(x, ((0, Bp - B), (0, Ep - E)))
    offp = off2d if Ep == E else jnp.pad(off2d, ((0, 0), (0, Ep - E)))

    out = pl.pallas_call(
        _offset_kernel,
        out_shape=jax.ShapeDtypeStruct((Bp, Ep), x.dtype),
        grid_spec=pltpu.PrefetchScalarGridSpec(
            num_scalar_prefetch=0,
            grid=(Bp // tm, Ep // te),
            in_specs=[
                pl.BlockSpec((tm, te), lambda i, j: (i, j)),
                pl.BlockSpec((1, te), lambda i, j: (0, j)),
            ],
            out_specs=pl.BlockSpec((tm, te), lambda i, j: (i, j)),
        ),
        compiler_params=pltpu.CompilerParams(
            dimension_semantics=("parallel", "parallel")),
    )(xp, offp)
    return out[:B, :E] if (Bp, Ep) != (B, E) else out


# ----------------------------- mlp path -------------------------------------

_MLP_VMEM_BUDGET = 24 << 20            # double-buffered blocks budget (all gens)
_MLP_VMEM_LIMIT = 32 << 20             # scoped VMEM limit (safe v5e/v6e/v7x)
_MLP_WEIGHT_RESIDENT_BYTES = 10 << 20  # fast path: full W as a single K block


def _mlp_single_k_kernel(x_ref, w_ref, b_ref, o_ref):
    # x_ref: [tm, Kp], w_ref: [Kp, tn], b_ref: [1, tn] f32, o_ref: [tm, tn]
    h = jnp.maximum(x_ref[...], jnp.zeros((), x_ref.dtype))       # nn.ReLU()
    acc = jnp.dot(h, w_ref[...], preferred_element_type=jnp.float32)
    o_ref[...] = (acc + b_ref[...].astype(jnp.float32)).astype(o_ref.dtype)


def _mlp_tiled_kernel(x_ref, w_ref, b_ref, o_ref, acc_ref):
    # x_ref: [tm, tk], w_ref: [tk, tn], b_ref: [1, tn] f32,
    # o_ref: [tm, tn], acc_ref: [tm, tn] f32 accumulator (lives across k).
    k = pl.program_id(2)

    @pl.when(k == 0)
    def _init():
        acc_ref[...] = jnp.zeros_like(acc_ref)

    h = jnp.maximum(x_ref[...], jnp.zeros((), x_ref.dtype))       # nn.ReLU()
    acc_ref[...] += jnp.dot(h, w_ref[...], preferred_element_type=jnp.float32)

    @pl.when(k == pl.num_programs(2) - 1)
    def _finalize():
        o_ref[...] = (acc_ref[...] + b_ref[...].astype(jnp.float32)
                      ).astype(o_ref.dtype)


@functools.partial(jax.jit,
                   static_argnames=("use_bf16", "out_features",
                                    "force_tiled", "max_tk"))
def mlp_forward(x, w, b, use_bf16=False, out_features=None,
                force_tiled=False, max_tk=1024):
    """x: [B, E], w: [E', O'] (possibly pre-padded to 128 multiples),
    b: [O'] -> relu(x) @ w + b, sliced back to [B, out_features]."""
    B, E = x.shape
    Kw, Ow = w.shape
    assert Kw >= E, "weight rows must cover the embedding size"
    O = out_features if out_features is not None else Ow
    out_dtype = x.dtype

    if use_bf16:
        x = x.astype(jnp.bfloat16)
        w = w.astype(jnp.bfloat16)

    ex = x.dtype.itemsize
    ew = w.dtype.itemsize
    eo = out_dtype.itemsize
    align_m = 16 if use_bf16 else 8

    Kp = _round_up(Kw, 128)
    Np = _round_up(Ow, 128)
    # No-ops when params were pre-padded at add_task time.
    wp = w if (Kp, Np) == (Kw, Ow) else jnp.pad(w, ((0, Kp - Kw), (0, Np - Ow)))
    b2d = b.reshape(1, -1).astype(jnp.float32)
    bp = b2d if b2d.shape[1] == Np else jnp.pad(
        b2d, ((0, 0), (0, Np - b2d.shape[1])))

    tm, Mp = _even_tiles(B, 512, align_m)
    m_blocks = Mp // tm

    # ---- Path A: weight-resident single-K (no accumulator, no k axis) ----
    if (not force_tiled) and Kp * Np * ew <= _MLP_WEIGHT_RESIDENT_BYTES:
        if m_blocks == 1 and Np >= 256:
            tn = _largest_tile(Np, Np // 2)   # >=2 N blocks for v7x megacore
        else:
            tn = Np
        fixed = 2 * Kp * tn * ew + 2 * tn * 4
        per_row = 2 * Kp * ex + 2 * tn * eo
        tm_cap = (_MLP_VMEM_BUDGET - fixed) // per_row
        if tm_cap >= align_m:
            tm, Mp = _even_tiles(B, min(512, (tm_cap // align_m) * align_m),
                                 align_m)
            xp = x if (Mp, Kp) == (B, E) else jnp.pad(
                x, ((0, Mp - B), (0, Kp - E)))
            out = pl.pallas_call(
                _mlp_single_k_kernel,
                out_shape=jax.ShapeDtypeStruct((Mp, Np), out_dtype),
                grid_spec=pltpu.PrefetchScalarGridSpec(
                    num_scalar_prefetch=0,
                    grid=(Mp // tm, Np // tn),
                    in_specs=[
                        pl.BlockSpec((tm, Kp), lambda i, j: (i, 0)),
                        pl.BlockSpec((Kp, tn), lambda i, j: (0, j)),
                        pl.BlockSpec((1, tn), lambda i, j: (0, j)),
                    ],
                    out_specs=pl.BlockSpec((tm, tn), lambda i, j: (i, j)),
                ),
                compiler_params=pltpu.CompilerParams(
                    dimension_semantics=("parallel", "parallel"),
                    vmem_limit_bytes=_MLP_VMEM_LIMIT),
            )(xp, wp, bp)
            return out[:B, :O] if (Mp, Np) != (B, O) else out
        # else: fall through to the tiled path.

    # ---- Path B: output-stationary tiled matmul with k reduction ----
    tk = _largest_tile(Kp, min(1024, max_tk))
    if m_blocks == 1 and Np >= 256:
        tn = _largest_tile(Np, max(128, min(512, Np // 2)))
    else:
        tn = _largest_tile(Np, 512)

    def _fits(tm_, tk_, tn_):
        need = (2 * tm_ * tk_ * ex + 2 * tk_ * tn_ * ew + 2 * tn_ * 4
                + 2 * tm_ * tn_ * eo + tm_ * tn_ * 4)
        return need <= _MLP_VMEM_BUDGET

    while not _fits(tm, tk, tn) and tk > 128:
        tk = _largest_tile(Kp, tk // 2)
    while not _fits(tm, tk, tn) and tn > 128:
        tn = _largest_tile(Np, tn // 2)
    while not _fits(tm, tk, tn) and tm > align_m:
        tm = max(align_m, ((tm // 2) // align_m) * align_m)
    tm, Mp = _even_tiles(B, tm, align_m)

    xp = x if (Mp, Kp) == (B, E) else jnp.pad(x, ((0, Mp - B), (0, Kp - E)))

    out = pl.pallas_call(
        _mlp_tiled_kernel,
        out_shape=jax.ShapeDtypeStruct((Mp, Np), out_dtype),
        grid_spec=pltpu.PrefetchScalarGridSpec(
            num_scalar_prefetch=0,
            grid=(Mp // tm, Np // tn, Kp // tk),      # reduction axis last
            in_specs=[
                pl.BlockSpec((tm, tk), lambda i, j, k: (i, k)),
                pl.BlockSpec((tk, tn), lambda i, j, k: (k, j)),
                pl.BlockSpec((1, tn), lambda i, j, k: (0, j)),
            ],
            out_specs=pl.BlockSpec((tm, tn), lambda i, j, k: (i, j)),
            scratch_shapes=[pltpu.VMEM((tm, tn), jnp.float32)],
        ),
        compiler_params=pltpu.CompilerParams(
            dimension_semantics=("parallel", "parallel", "arbitrary"),
            vmem_limit_bytes=_MLP_VMEM_LIMIT),
    )(xp, wp, bp)
    return out[:B, :O] if (Mp, Np) != (B, O) else out


# ----------------------------- module port ----------------------------------

class Projector:
    """JAX/Pallas port of the PyTorch Projector module."""

    def __init__(self, proj_type="offset", key=None, use_bf16=False):
        assert proj_type in ("offset", "mlp"), \
            "Projection type must be one of: [offset, mlp]"
        self.proj_type = proj_type
        self.use_bf16 = use_bf16
        self.values = []
        self._key = key if key is not None else jax.random.PRNGKey(0)

    def reset(self):
        self.values = []

    def _next_key(self):
        self._key, sub = jax.random.split(self._key)
        return sub

    def add_task(self, embedding_size, out_size=None):
        if self.proj_type == "offset":
            off = jax.random.normal(self._next_key(), (embedding_size,),
                                    dtype=jnp.float32)        # torch.randn(E)
            self.values.append(off)
        elif self.proj_type == "mlp":
            if out_size is None:
                out_size = embedding_size
            kw, kb = jax.random.split(self._next_key())
            bound = 1.0 / (embedding_size ** 0.5)
            w = jax.random.uniform(kw, (embedding_size, out_size),
                                   minval=-bound, maxval=bound,
                                   dtype=jnp.float32)
            b = jax.random.uniform(kb, (out_size,),
                                   minval=-bound, maxval=bound,
                                   dtype=jnp.float32)
            # Pad (and optionally cast) the parameters once here, not per call.
            Kp = _round_up(embedding_size, 128)
            Np = _round_up(out_size, 128)
            wdt = jnp.bfloat16 if self.use_bf16 else jnp.float32
            wp = jnp.pad(w, ((0, Kp - embedding_size),
                             (0, Np - out_size))).astype(wdt)
            bp = jnp.pad(b, (0, Np - out_size))
            self.values.append(dict(w=wp, b=bp, out=out_size,
                                    w_raw=w, b_raw=b))

    def forward(self, x, i):
        if self.proj_type == "offset":
            return offset_forward(x, self.values[i])
        v = self.values[i]
        return mlp_forward(x, v["w"], v["b"], use_bf16=self.use_bf16,
                           out_features=v["out"])

    __call__ = forward


# ----------------------------- demo / check ---------------------------------

if __name__ == "__main__":
    key = jax.random.PRNGKey(0)
    kx, kx2, kx3, kp = jax.random.split(key, 4)

    B, E = 8, 128
    x = jax.random.normal(kx, (B, E), dtype=jnp.float32)

    # --- offset, aligned ---
    proj_off = Projector("offset", key=kp)
    proj_off.add_task(E)
    proj_off.add_task(E)
    y_off = jax.block_until_ready(proj_off(x, 1))
    assert jnp.allclose(y_off, x + proj_off.values[1], atol=1e-6), "offset"

    # --- offset, odd shapes (padding path) ---
    x_odd = jax.random.normal(kx2, (5, 96), dtype=jnp.float32)
    proj_odd = Projector("offset", key=kp)
    proj_odd.add_task(96)
    y_odd = jax.block_until_ready(proj_odd(x_odd, 0))
    assert jnp.allclose(y_odd, x_odd + proj_odd.values[0], atol=1e-6), \
        "offset (padded)"

    # --- offset, forced lane split (exercises the E-tiled path) ---
    x_wide = jax.random.normal(kx3, (8, 384), dtype=jnp.float32)
    off_wide = jax.random.normal(kp, (384,), dtype=jnp.float32)
    y_wide = jax.block_until_ready(
        offset_forward(x_wide, off_wide, vmem_budget=32 * 1024))
    assert jnp.allclose(y_wide, x_wide + off_wide, atol=1e-6), "offset (split)"

    # --- mlp, weight-resident single-K path ---
    proj_mlp = Projector("mlp", key=kp)
    proj_mlp.add_task(E)                 # O = 128
    proj_mlp.add_task(E, out_size=256)   # O = 256 -> N split across 2 blocks
    y0 = jax.block_until_ready(proj_mlp(x, 0))
    v0 = proj_mlp.values[0]
    ref0 = jnp.maximum(x, 0.0) @ v0["w_raw"] + v0["b_raw"]
    assert jnp.allclose(y0, ref0, atol=1e-4), "mlp"

    y1 = jax.block_until_ready(proj_mlp(x, 1))
    v1 = proj_mlp.values[1]
    ref1 = jnp.maximum(x, 0.0) @ v1["w_raw"] + v1["b_raw"]
    assert jnp.allclose(y1, ref1, atol=1e-4), "mlp (O=256, N-split)"

    # --- mlp, forced multi-K tiled path (standalone, unpadded params) ---
    E3, O3 = 256, 128
    x3 = jax.random.normal(kx2, (B, E3), dtype=jnp.float32)
    kw3, kb3 = jax.random.split(kp)
    w3 = jax.random.uniform(kw3, (E3, O3), minval=-0.06, maxval=0.06,
                            dtype=jnp.float32)
    b3 = jax.random.uniform(kb3, (O3,), minval=-0.06, maxval=0.06,
                            dtype=jnp.float32)
    y3 = jax.block_until_ready(
        mlp_forward(x3, w3, b3, force_tiled=True, max_tk=128))
    ref3 = jnp.maximum(x3, 0.0) @ w3 + b3
    assert jnp.allclose(y3, ref3, atol=1e-4), "mlp (tiled, multi-K)"

    # --- mlp, bf16 weight-stream path (f32 accumulator), looser tolerance ---
    proj_bf = Projector("mlp", key=kp, use_bf16=True)
    proj_bf.add_task(E)
    yb = jax.block_until_ready(proj_bf(x, 0))
    vb = proj_bf.values[0]
    refb = jnp.maximum(x, 0.0) @ vb["w_raw"] + vb["b_raw"]
    assert jnp.allclose(yb, refb, atol=5e-2, rtol=5e-2), "mlp (bf16)"

    # --- mlp, odd shapes (padding path) ---
    proj_mo = Projector("mlp", key=kp)
    proj_mo.add_task(96, out_size=40)
    y_mo = jax.block_until_ready(proj_mo(x_odd, 0))
    vm = proj_mo.values[0]
    ref_mo = jnp.maximum(x_odd, 0.0) @ vm["w_raw"] + vm["b_raw"]
    assert jnp.allclose(y_mo, ref_mo, atol=1e-4), "mlp (padded)"

    print("KERNEL_OK")
</pallas_src>

<mosaic_0001>
module attributes {stable_mosaic.version = 11 : i64} {
  func.func @_offset_kernel(%arg0: i32, %arg1: i32, %arg2: memref<8x128xf32, #tpu.memory_space<vmem>>, %arg3: memref<1x128xf32, #tpu.memory_space<vmem>>, %arg4: memref<8x128xf32, #tpu.memory_space<vmem>>) attributes {dimension_semantics = [#tpu.dimension_semantics<parallel>, #tpu.dimension_semantics<parallel>], iteration_bounds = array<i64: 1, 1>, scalar_prefetch = 0 : i64, scratch_operands = 0 : i64, tpu.core_type = #tpu.core_type<tc>, window_params = [{transform_indices = @transform_0, window_bounds = array<i64: 8, 128>}, {transform_indices = @transform_1, window_bounds = array<i64: 1, 128>}, {transform_indices = @transform_2, window_bounds = array<i64: 8, 128>}]} {
    %c0 = arith.constant 0 : index
    %c0_0 = arith.constant 0 : index
    %0 = vector.load %arg2[%c0, %c0_0] : memref<8x128xf32, #tpu.memory_space<vmem>>, vector<8x128xf32>
    %c0_1 = arith.constant 0 : index
    %c0_2 = arith.constant 0 : index
    %1 = vector.load %arg3[%c0_1, %c0_2] : memref<1x128xf32, #tpu.memory_space<vmem>>, vector<1x128xf32>
    %2 = vector.broadcast %1 : vector<1x128xf32> to vector<8x128xf32>
    %3 = arith.addf %0, %2 : vector<8x128xf32>
    %c0_3 = arith.constant 0 : index
    %c0_4 = arith.constant 0 : index
    %4 = vector.load %arg4[%c0_3, %c0_4] : memref<8x128xf32, #tpu.memory_space<vmem>>, vector<8x128xf32>
    tpu.vector_store %arg4[%c0_3, %c0_4], %3 {strides = array<i32>} : memref<8x128xf32, #tpu.memory_space<vmem>>, vector<8x128xf32>,
    return
  }
  func.func @transform_0(%arg0: i32, %arg1: i32) -> (i32, i32) {
    %c0_i32 = arith.constant 0 : i32
    return %arg0, %arg1 : i32, i32
  }
  func.func @transform_1(%arg0: i32, %arg1: i32) -> (i32, i32) {
    %c0_i32 = arith.constant 0 : i32
    %c0_i32_0 = arith.constant 0 : i32
    return %c0_i32, %arg1 : i32, i32
  }
  func.func @transform_2(%arg0: i32, %arg1: i32) -> (i32, i32) {
    %c0_i32 = arith.constant 0 : i32
    return %arg0, %arg1 : i32, i32
  }
}

</mosaic_0001>

<llo_original>
// kernel: offset_forward.1
$region0: #{offset_forward.1}
  #allocation0 [shape = 'u32[]', space=smem, size = 0x4, offset = 0x4, fixed_abs, tag = 'smem constant byte address 0x4 - core index']
  #allocation1 [shape = 'u32[144,128]{1,0:T(1,128)}', space=vmem, size = 0x12000, scoped, tag = 'internal scratch']
  %s0 = inlined_call_operand.hbm [shape: f32[8,128], index: 0, kind: input, shape index: {}]
  %s1 = inlined_call_operand.vmem [shape: f32[1,128], index: 1, kind: input, shape index: {}]
  %s2 = inlined_call_operand.hbm [shape: f32[8,128], index: 2, kind: output, shape index: {}]
  %s3 = sld [smem:[#allocation0]]
  $region22: #{offset_forward.1} parent=0
    _
  %s5 = ssub.s32 1, %s3
  %s6 = scalar_select 0, %s5, %s3
  $region1: #{offset_forward.1} parent=0
    #allocation2 [shape = 'u8[4096]{0}', space=vmem, size = 0x1000, scoped, tag = 'input window, operand 0, single buffered']
    #allocation3 [shape = 's32[1]{0}', space=sflag, size = 0x4, scoped, tag = 'scoped memory for offset_forward.1']
    #allocation4 [shape = 's32[1]{0}', space=sflag, size = 0x4, scoped, tag = 'scoped memory for offset_forward.1']
    #allocation5 [shape = 'u8[4096]{0}', space=vmem, size = 0x1000, scoped, tag = 'output window, operand 0, single buffered']
    %7 = vsyncpa [#allocation3], 0
    %8 = vsyncpa [#allocation4], 0
    // Predicated region
    $region2: #{offset_forward.1} parent=1 // pred_check
      _
    $region3: #{offset_forward.1} parent=1 // pred_check_branch
      %10 = sbr.rel (0) target = $region5
    $region4: #{offset_forward.1} parent=1 // pred_region
      %s12 = ssub.s32 128, 128
      %13 = vsyncadd [#allocation3], %s12
      %s15 = sshll.u32 [#allocation2], 4
      %s16 = int_to_ptr.vmem [resolvable:$true] %s15
      %18 = dma.hbm_to_vmem [thread:$0]  %s0, 128, %s16, [#allocation3]
    $region5: #{offset_forward.1} parent=1 // pred_fallthru
      _
    // Predicated region
    $region6: #{offset_forward.1} parent=1 // pred_check
      _
    $region7: #{offset_forward.1} parent=1 // pred_check_branch
      %20 = sbr.rel (0) target = $region9
    $region8: #{offset_forward.1} parent=1 // pred_region
      _
    $region9: #{offset_forward.1} parent=1 // pred_fallthru
      _
    // Predicated region
    $region10: #{offset_forward.1} parent=1 // pred_check
      _
    $region11: #{offset_forward.1} parent=1 // pred_check_branch
      %22 = sbr.rel (0) target = $region13
    $region12: #{offset_forward.1} parent=1 // pred_region
      %23 = dma.done [#allocation3], 128
    $region13: #{offset_forward.1} parent=1 // pred_fallthru
      _
    %v24 = vld [vmem:[#allocation2] sm:$0xff]
    %v25 = vld [vmem:[%s1] sm:$0x1]
    %v27 = vlaneseq
    %v28 = vshrl.u32 %v27, 7
    %v29 = vsub.s32 0, %v28
    %v30 = vrot.slane %v25, %v29
    %v32 = vadd.f32 %v24, %v30
    %33 = vst [vmem:[#allocation5] sm:$0xff] %v32
    // Predicated region
    $region14: #{offset_forward.1} parent=1 // pred_check
      _
    $region15: #{offset_forward.1} parent=1 // pred_check_branch
      %35 = sbr.rel (0) target = $region17
    $region16: #{offset_forward.1} parent=1 // pred_region
      %s37 = ssub.s32 128, 128
      %38 = vsyncadd [#allocation4], %s37
      %s40 = sshll.u32 [#allocation5], 4
      %s41 = int_to_ptr.vmem [resolvable:$true] %s40
      %43 = dma.vmem_to_hbm [thread:$0]  %s41, 128, %s2, [#allocation4]
    $region17: #{offset_forward.1} parent=1 // pred_fallthru
      _
    // Predicated region
    $region18: #{offset_forward.1} parent=1 // pred_check
      _
    $region19: #{offset_forward.1} parent=1 // pred_check_branch
      %45 = sbr.rel (0) target = $region21
    $region20: #{offset_forward.1} parent=1 // pred_region
      %46 = dma.done [#allocation4], 128
    $region21: #{offset_forward.1} parent=1 // pred_fallthru
      _
    %47 = vsyncpa [#allocation3], 1
    %48 = vsyncpa [#allocation4], 1

</llo_original>
